<compile_context>
chip_gen: v7x
topology: tpu7x:2x2x1
jax: 0.10.0
libtpu: 0.0.40
codegen_flags: <defaults>
</compile_context>

<pallas_src>
import functools

import jax
import jax.numpy as jnp
from jax import lax
from jax.experimental import pallas as pl
from jax.experimental.pallas import tpu as pltpu


def _round_up(x, m):
    return (x + m - 1) // m * m


def _vq_kernel(zt_ref, waug_ref, qt_ref, idx_ref, sq_ref, *, n_total):
    # zt   (C+1, TN): transposed rows of z_flat, last row is all-ones
    # waug (Kp, C+1): [-2*W | ||W||^2], padded rows have huge norm
    zt_aug = zt_ref[...]
    waug = waug_ref[...]
    kp = waug.shape[0]
    c = qt_ref.shape[0]
    tn = zt_aug.shape[1]

    # d[k, n] = ||w_k||^2 - 2 <w_k, z_n>   (bias folded into the matmul;
    # ||z_n||^2 is a per-column constant so it does not affect the argmin)
    d = jnp.dot(waug, zt_aug, preferred_element_type=jnp.float32)    # (Kp, TN)

    # argmin over codewords (first occurrence on ties), lane-dense result.
    dmin = jnp.min(d, axis=0, keepdims=True)                         # (1, TN)
    rows = lax.broadcasted_iota(jnp.int32, d.shape, 0)                # (Kp, TN)
    idx = jnp.min(jnp.where(d == dmin, rows, kp), axis=0, keepdims=True)
    idx_ref[...] = idx                                               # (1, TN)

    # gather the selected codewords with a one-hot MXU matmul, reusing w_aug:
    # rows of w_aug are -2*w, so rescale by -0.5 (exact: powers of two).
    onehot = (rows == idx).astype(jnp.float32)                       # (Kp, TN)
    g = lax.dot_general(waug, onehot, (((0,), (0,)), ((), ())),
                        preferred_element_type=jnp.float32)          # (C+1, TN)
    qt = -0.5 * g[:c, :]                                             # (C, TN)
    qt_ref[...] = qt.astype(qt_ref.dtype)

    # per-column loss contribution: exact (q - z)^2 summed over channels,
    # written lane-dense; ragged tail columns masked to zero.
    z = zt_aug[:c, :]
    diff = qt - z
    sq = jnp.sum(diff * diff, axis=0, keepdims=True)                 # (1, TN)
    col = pl.program_id(0) * tn + lax.broadcasted_iota(jnp.int32, (1, tn), 1)
    sq_ref[...] = jnp.where(col < n_total, sq, 0.0)


def vq_codebook_forward(z_e, weight, beta=0.25):
    """Forward pass of VQCodebook.

    z_e   : (batch, channels, length), channels == codebook_dim
    weight: (num_codewords, codebook_dim)
    returns (quantized (L, C, B), indices (L*B,), vq_loss scalar)
    """
    b, c, l = z_e.shape
    k, cd = weight.shape
    if c != cd:
        raise RuntimeError(f"Expected input to have {cd} channels, got {c}")
    n = l * b
    out_dtype = weight.dtype

    # --- PyTorch-exact flattening (permute(2,1,0) then .view(-1, C)) --------
    # Rows of z_flat are contiguous length-C chunks of the (l, c, b)-ordered
    # buffer; this interleaves channel/batch when B > 1, exactly like torch.
    z_p = jnp.transpose(z_e, (2, 1, 0))                              # (L, C, B)
    z_flat = z_p.reshape(n, c).astype(jnp.float32)                   # (N, C)
    zt = z_flat.T                                                    # (C, N)

    # --- hoisted weight precompute: augmented codebook [-2W | ||W||^2] ------
    kp = _round_up(max(k, 8), 8)
    w32 = weight.astype(jnp.float32)
    ww = jnp.sum(w32 * w32, axis=1, keepdims=True)                   # (K, 1)
    waug = jnp.concatenate([-2.0 * w32, ww], axis=1)                 # (K, C+1)
    if kp > k:
        pad = jnp.concatenate(
            [jnp.zeros((kp - k, c), jnp.float32),
             jnp.full((kp - k, 1), 1e30, jnp.float32)], axis=1)
        waug = jnp.concatenate([waug, pad], axis=0)                  # (Kp, C+1)

    # --- budget-driven row-tile size -----------------------------------------
    def vmem_usage(tn_):
        resident = 2 * kp * (c + 1) * 4                      # w_aug (2 bufs)
        pipelined = 2 * ((c + 1) + c + 2) * tn_ * 4          # z/q/idx/sq tiles
        temps = (4 * kp + 2 * (c + 1)) * tn_ * 4             # d/iota/onehot/g
        return resident + pipelined + temps

    budget = 24 * 1024 * 1024
    if n <= 512 and vmem_usage(n) <= budget:
        tn = n                      # single lane-dense tile (block == array)
    else:
        tn = 2048
        while tn > 128 and (vmem_usage(tn) > budget or tn >= 2 * n):
            tn //= 2
    n_pad = _round_up(n, tn)
    num_tiles = n_pad // tn

    # augmented z^T: append the ones row, pad columns up to a full tile grid
    zt_aug = jnp.concatenate([zt, jnp.ones((1, n), jnp.float32)], axis=0)
    if n_pad > n:
        zt_aug = jnp.pad(zt_aug, ((0, 0), (0, n_pad - n)))

    vmem_limit = int(min(48 * 1024 * 1024,
                         max(16 * 1024 * 1024, 2 * vmem_usage(tn))))

    kernel = functools.partial(_vq_kernel, n_total=n)
    qt, idx, sq = pl.pallas_call(
        kernel,
        grid=(num_tiles,),
        in_specs=[
            pl.BlockSpec((c + 1, tn), lambda i: (0, i)),   # z^T tile (pipelined)
            pl.BlockSpec((kp, c + 1), lambda i: (0, 0)),   # augmented codebook
        ],
        out_specs=(
            pl.BlockSpec((c, tn), lambda i: (0, i)),       # quantized^T tile
            pl.BlockSpec((1, tn), lambda i: (0, i)),       # indices (lane-dense)
            pl.BlockSpec((1, tn), lambda i: (0, i)),       # per-column (q-z)^2
        ),
        out_shape=(
            jax.ShapeDtypeStruct((c, n_pad), out_dtype),
            jax.ShapeDtypeStruct((1, n_pad), jnp.int32),
            jax.ShapeDtypeStruct((1, n_pad), jnp.float32),
        ),
        compiler_params=pltpu.CompilerParams(
            dimension_semantics=("parallel",),
            vmem_limit_bytes=vmem_limit),
    )(zt_aug, waug)

    # quantized^T (C, N) -> (N, C) -> view as (L, C, B) (same memory order as
    # torch's embedding(indices).view(z_e.shape) after the permute).
    quantized = qt[:, :n].T.reshape(l, c, b)
    indices = idx[0, :n]
    vq_loss = (1.0 + beta) * jnp.sum(sq) / (n * c)
    # TODO(synk): detach / straight-through only affects the backward pass;
    # the forward loss value is exactly (1 + beta) * mean((q - z)^2).
    return quantized, indices, vq_loss


if __name__ == "__main__":
    codebook_dim = 16
    num_codewords = 64
    batch, length = 2, 16
    beta = 0.25

    key = jax.random.PRNGKey(0)
    kw, kz = jax.random.split(key)
    # deterministic init: embedding.weight ~ U(-1, 1), shape (K, C)
    weight = jax.random.uniform(kw, (num_codewords, codebook_dim),
                                jnp.float32, minval=-1.0, maxval=1.0)
    z_e = jax.random.normal(kz, (batch, codebook_dim, length), jnp.float32)

    fwd = jax.jit(functools.partial(vq_codebook_forward, beta=beta))
    quantized, indices, vq_loss = jax.block_until_ready(fwd(z_e, weight))

    # pure-JAX reference reproducing the PyTorch forward exactly
    z_p = jnp.transpose(z_e, (2, 1, 0))                    # permute(2, 1, 0)
    z_flat = z_p.reshape(-1, codebook_dim)                 # .view(-1, C)
    d = (jnp.sum(z_flat ** 2, axis=1, keepdims=True)
         + jnp.sum(weight ** 2, axis=1)
         - 2.0 * z_flat @ weight.T)
    ref_idx = jnp.argmin(d, axis=1).astype(jnp.int32)
    ref_q = weight[ref_idx].reshape(z_p.shape)
    ref_loss = (1.0 + beta) * jnp.mean((ref_q - z_p) ** 2)

    assert quantized.shape == (length, codebook_dim, batch)
    assert indices.shape == (length * batch,)
    assert jnp.array_equal(indices, ref_idx)
    assert jnp.allclose(quantized, ref_q, atol=1e-5)
    assert jnp.allclose(vq_loss, ref_loss, atol=1e-5, rtol=1e-4)

    print("KERNEL_OK")
</pallas_src>

<mosaic_0001>
module attributes {stable_mosaic.version = 11 : i64} {
  func.func @_vq_kernel(%arg0: i32, %arg1: memref<17x32xf32, #tpu.memory_space<vmem>>, %arg2: memref<64x17xf32, #tpu.memory_space<vmem>>, %arg3: memref<16x32xf32, #tpu.memory_space<vmem>>, %arg4: memref<1x32xi32, #tpu.memory_space<vmem>>, %arg5: memref<1x32xf32, #tpu.memory_space<vmem>>) attributes {dimension_semantics = [#tpu.dimension_semantics<parallel>], iteration_bounds = array<i64: 1>, scalar_prefetch = 0 : i64, scratch_operands = 0 : i64, tpu.core_type = #tpu.core_type<tc>, window_params = [{transform_indices = @transform_0, window_bounds = array<i64: 17, 32>}, {pipeline_mode = #tpu.pipeline_mode<synchronous>, transform_indices = @transform_1, window_bounds = array<i64: 64, 17>}, {transform_indices = @transform_2, window_bounds = array<i64: 16, 32>}, {transform_indices = @transform_3, window_bounds = array<i64: 1, 32>}, {transform_indices = @transform_4, window_bounds = array<i64: 1, 32>}]} {
    %c0 = arith.constant 0 : index
    %c0_0 = arith.constant 0 : index
    %0 = vector.load %arg1[%c0, %c0_0] : memref<17x32xf32, #tpu.memory_space<vmem>>, vector<17x32xf32>
    %c0_1 = arith.constant 0 : index
    %c0_2 = arith.constant 0 : index
    %1 = vector.load %arg2[%c0_1, %c0_2] : memref<64x17xf32, #tpu.memory_space<vmem>>, vector<64x17xf32>
    %cst = arith.constant dense<0.000000e+00> : vector<64x32xf32>
    %2 = tpu.matmul %1, %0, %cst {dimension_numbers = #tpu.dot_dimension_numbers<[1], [0], [0], [1], [0, 0, 1, 1], [], []>} : vector<64x17xf32>, vector<17x32xf32>, vector<64x32xf32> -> vector<64x32xf32>
    %cst_3 = arith.constant dense<0x7F800000> : vector<32xf32>
    %3 = vector.multi_reduction <minimumf>, %2, %cst_3 [0] : vector<64x32xf32> to vector<32xf32>
    %4 = vector.shape_cast %3 : vector<32xf32> to vector<1x32xf32>
    %5 = tpu.iota {dimensions = array<i32: 0>} : vector<64x32xi32>
    %6 = vector.broadcast %4 : vector<1x32xf32> to vector<64x32xf32>
    %7 = arith.cmpf oeq, %2, %6 : vector<64x32xf32>
    %c64_i32 = arith.constant 64 : i32
    %8 = vector.broadcast %c64_i32 : i32 to vector<64x32xi32>
    %9 = arith.select %7, %5, %8 : vector<64x32xi1>, vector<64x32xi32>
    %cst_4 = arith.constant dense<2147483647> : vector<32xi32>
    %10 = vector.multi_reduction <minsi>, %9, %cst_4 [0] : vector<64x32xi32> to vector<32xi32>
    %11 = vector.shape_cast %10 : vector<32xi32> to vector<1x32xi32>
    %c0_5 = arith.constant 0 : index
    %c0_6 = arith.constant 0 : index
    %12 = vector.load %arg4[%c0_5, %c0_6] : memref<1x32xi32, #tpu.memory_space<vmem>>, vector<1x32xi32>
    tpu.vector_store %arg4[%c0_5, %c0_6], %11 {strides = array<i32>} : memref<1x32xi32, #tpu.memory_space<vmem>>, vector<1x32xi32>,
    %13 = vector.broadcast %11 : vector<1x32xi32> to vector<64x32xi32>
    %14 = arith.cmpi eq, %5, %13 : vector<64x32xi32>
    %15 = arith.extui %14 : vector<64x32xi1> to vector<64x32xi32>
    %16 = arith.sitofp %15 : vector<64x32xi32> to vector<64x32xf32>
    %cst_7 = arith.constant dense<0.000000e+00> : vector<17x32xf32>
    %17 = tpu.matmul %1, %16, %cst_7 {dimension_numbers = #tpu.dot_dimension_numbers<[0], [0], [1], [1], [0, 1, 1, 1], [], []>} : vector<64x17xf32>, vector<64x32xf32>, vector<17x32xf32> -> vector<17x32xf32>
    %18 = vector.extract_strided_slice %17 {offsets = [0, 0], sizes = [16, 32], strides = [1, 1]} : vector<17x32xf32> to vector<16x32xf32>
    %cst_8 = arith.constant -5.000000e-01 : f32
    %19 = vector.broadcast %cst_8 : f32 to vector<16x32xf32>
    %20 = arith.mulf %19, %18 : vector<16x32xf32>
    %c0_9 = arith.constant 0 : index
    %c0_10 = arith.constant 0 : index
    %21 = vector.load %arg3[%c0_9, %c0_10] : memref<16x32xf32, #tpu.memory_space<vmem>>, vector<16x32xf32>
    tpu.vector_store %arg3[%c0_9, %c0_10], %20 {strides = array<i32>} : memref<16x32xf32, #tpu.memory_space<vmem>>, vector<16x32xf32>,
    %22 = vector.extract_strided_slice %0 {offsets = [0, 0], sizes = [16, 32], strides = [1, 1]} : vector<17x32xf32> to vector<16x32xf32>
    %23 = arith.subf %20, %22 : vector<16x32xf32>
    %24 = arith.mulf %23, %23 : vector<16x32xf32>
    %cst_11 = arith.constant dense<0.000000e+00> : vector<32xf32>
    %25 = vector.multi_reduction <add>, %24, %cst_11 [0] : vector<16x32xf32> to vector<32xf32>
    %26 = vector.shape_cast %25 : vector<32xf32> to vector<1x32xf32>
    %c32_i32 = arith.constant 32 : i32
    %27 = arith.muli %arg0, %c32_i32 : i32
    %28 = tpu.iota {dimensions = array<i32: 1>} : vector<1x32xi32>
    %29 = vector.broadcast %27 : i32 to vector<1x32xi32>
    %30 = arith.addi %29, %28 : vector<1x32xi32>
    %c32_i32_12 = arith.constant 32 : i32
    %31 = vector.broadcast %c32_i32_12 : i32 to vector<1x32xi32>
    %32 = arith.cmpi slt, %30, %31 : vector<1x32xi32>
    %cst_13 = arith.constant 0.000000e+00 : f32
    %33 = vector.broadcast %cst_13 : f32 to vector<1x32xf32>
    %34 = arith.select %32, %26, %33 : vector<1x32xi1>, vector<1x32xf32>
    %c0_14 = arith.constant 0 : index
    %c0_15 = arith.constant 0 : index
    %35 = vector.load %arg5[%c0_14, %c0_15] : memref<1x32xf32, #tpu.memory_space<vmem>>, vector<1x32xf32>
    tpu.vector_store %arg5[%c0_14, %c0_15], %34 {strides = array<i32>} : memref<1x32xf32, #tpu.memory_space<vmem>>, vector<1x32xf32>,
    return
  }
  func.func @transform_0(%arg0: i32) -> (i32, i32) {
    %c0_i32 = arith.constant 0 : i32
    %c0_i32_0 = arith.constant 0 : i32
    return %c0_i32, %arg0 : i32, i32
  }
  func.func @transform_1(%arg0: i32) -> (i32, i32) {
    %c0_i32 = arith.constant 0 : i32
    %c0_i32_0 = arith.constant 0 : i32
    %c0_i32_1 = arith.constant 0 : i32
    return %c0_i32, %c0_i32_0 : i32, i32
  }
  func.func @transform_2(%arg0: i32) -> (i32, i32) {
    %c0_i32 = arith.constant 0 : i32
    %c0_i32_0 = arith.constant 0 : i32
    return %c0_i32, %arg0 : i32, i32
  }
  func.func @transform_3(%arg0: i32) -> (i32, i32) {
    %c0_i32 = arith.constant 0 : i32
    %c0_i32_0 = arith.constant 0 : i32
    return %c0_i32, %arg0 : i32, i32
  }
  func.func @transform_4(%arg0: i32) -> (i32, i32) {
    %c0_i32 = arith.constant 0 : i32
    %c0_i32_0 = arith.constant 0 : i32
    return %c0_i32, %arg0 : i32, i32
  }
}

</mosaic_0001>

<llo_original>
// kernel: vq_codebook_forward.1
$region0: #{vq_codebook_forward.1}
  #allocation0 [shape = 'u32[]', space=smem, size = 0x4, offset = 0x4, fixed_abs, tag = 'smem constant byte address 0x4 - core index']
  #allocation1 [shape = 'u32[144,128]{1,0:T(1,128)}', space=vmem, size = 0x12000, scoped, tag = 'internal scratch']
  %s0 = inlined_call_operand.vmem [shape: f32[17,32], index: 0, kind: input, shape index: {}]
  %s1 = inlined_call_operand.vmem [shape: f32[64,17], index: 1, kind: input, shape index: {}]
  %s2 = inlined_call_operand.vmem [shape: f32[16,32], index: 2, kind: output, shape index: {0}]
  %s3 = inlined_call_operand.hbm [shape: s32[1,32], index: 3, kind: output, shape index: {1}]
  %s4 = inlined_call_operand.vmem [shape: f32[1,32], index: 4, kind: output, shape index: {2}]
  %5 = xla_tuple %s2, %s3, %s4
  %s6 = sld [smem:[#allocation0]]
  $region34: #{vq_codebook_forward.1} parent=0
    _
  %s8 = ssub.s32 1, %s6
  %s9 = scalar_select 0, %s8, %s6
  $region1: #{vq_codebook_forward.1} parent=0
    #allocation2 [shape = 'u8[512]{0}', space=vmem, size = 0x400, scoped, tag = 'output window, operand 1, single buffered']
    #allocation3 [shape = 's32[1]{0}', space=sflag, size = 0x4, scoped, tag = 'scoped memory for vq_codebook_forward.1']
    %10 = vsyncpa [#allocation3], 0
    // Predicated region
    $region2: #{vq_codebook_forward.1} parent=1 // pred_check
      _
    $region3: #{vq_codebook_forward.1} parent=1 // pred_check_branch
      %12 = sbr.rel (0) target = $region5
    $region4: #{vq_codebook_forward.1} parent=1 // pred_region
      _
    $region5: #{vq_codebook_forward.1} parent=1 // pred_fallthru
      _
    // Predicated region
    $region6: #{vq_codebook_forward.1} parent=1 // pred_check
      _
    $region7: #{vq_codebook_forward.1} parent=1 // pred_check_branch
      %14 = sbr.rel (0) target = $region9
    $region8: #{vq_codebook_forward.1} parent=1 // pred_region
      _
    $region9: #{vq_codebook_forward.1} parent=1 // pred_fallthru
      _
    %v15 = vld [vmem:[%s0] sm:$0xff]
    %v16 = vld [vmem:[%s0 + $0x8] sm:$0xff]
    %v17 = vld [vmem:[%s0 + $0x10] sm:$0x1]
    %v18 = vld [vmem:[%s1] sm:$0xff]
    %v19 = vld [vmem:[%s1 + $0x8] sm:$0xff]
    %v20 = vld [vmem:[%s1 + $0x10] sm:$0xff]
    %v21 = vld [vmem:[%s1 + $0x18] sm:$0xff]
    %v22 = vld [vmem:[%s1 + $0x20] sm:$0xff]
    %v23 = vld [vmem:[%s1 + $0x28] sm:$0xff]
    %v24 = vld [vmem:[%s1 + $0x30] sm:$0xff]
    %v25 = vld [vmem:[%s1 + $0x38] sm:$0xff]
    %vm26 = vcmask 138240
    %v28 = vsel %vm26, %v18, 0
    %v31 = vsel %vm26, %v19, 0
    %v34 = vsel %vm26, %v20, 0
    %v37 = vsel %vm26, %v21, 0
    %v40 = vsel %vm26, %v22, 0
    %v43 = vsel %vm26, %v23, 0
    %v46 = vsel %vm26, %v24, 0
    %v49 = vsel %vm26, %v25, 0
    %vm51 = vcmask 1040384
    %v53 = vsel %vm51, %v17, 0
    %55 = vmatprep.subr.mxu0 0.0
    %56 = vmatpush1.msra.mxu0 %v15
    %57 = vmatprep.subr.mxu0 0.0
    %58 = vmatpush1.msra.mxu0 %v16
    %59 = vmatprep.subr.mxu0 0.0
    %60 = vmatpush1.msra.mxu0 %v53
    %61 = vmatprep.subr.mxu0 0.0
    %62 = vmatpush1.msra.mxu0 0.0
    %63 = vmatprep.subr.mxu0 0.0
    %64 = vmatpush1.msra.mxu0 0.0
    %65 = vmatprep.subr.mxu0 0.0
    %66 = vmatpush1.msra.mxu0 0.0
    %67 = vmatprep.subr.mxu0 0.0
    %68 = vmatpush1.msra.mxu0 0.0
    %69 = vmatprep.subr.mxu0 0.0
    %70 = vmatpush1.msra.mxu0 0.0
    %71 = vmatprep.subr.mxu0 0.0
    %72 = vmatpush1.msra.mxu0 0.0
    %73 = vmatprep.subr.mxu0 0.0
    %74 = vmatpush1.msra.mxu0 0.0
    %75 = vmatprep.subr.mxu0 0.0
    %76 = vmatpush1.msra.mxu0 0.0
    %77 = vmatprep.subr.mxu0 0.0
    %78 = vmatpush1.msra.mxu0 0.0
    %79 = vmatprep.subr.mxu0 0.0
    %80 = vmatpush1.msra.mxu0 0.0
    %81 = vmatprep.subr.mxu0 0.0
    %82 = vmatpush1.msra.mxu0 0.0
    %83 = vmatprep.subr.mxu0 0.0
    %84 = vmatpush1.msra.mxu0 0.0
    %85 = vmatprep.subr.mxu0 0.0
    %86 = vmatpush1.msra.mxu0 0.0
    %87 = vmatprep.subr.mxu0 0.0
    %88 = vmatpush1.msra.mxu0 0.0
    %89 = vmatprep.subr.mxu0 0.0
    %90 = vmatpush1.msra.mxu0 0.0
    %91 = vmatprep.subr.mxu0 0.0
    %92 = vmatpush1.msra.mxu0 0.0
    %93 = vmatprep.subr.mxu0 0.0
    %94 = vmatpush1.msra.mxu0 0.0
    %95 = vmatprep.subr.mxu0 0.0
    %96 = vmatpush1.msra.mxu0 0.0
    %97 = vmatprep.subr.mxu0 0.0
    %98 = vmatpush1.msra.mxu0 0.0
    %99 = vmatprep.subr.mxu0 0.0
    %100 = vmatpush1.msra.mxu0 0.0
    %101 = vmatprep.subr.mxu0 0.0
    %102 = vmatpush1.msra.mxu0 0.0
    %103 = vmatprep.subr.mxu0 0.0
    %104 = vmatpush1.msra.mxu0 0.0
    %105 = vmatprep.subr.mxu0 0.0
    %106 = vmatpush1.msra.mxu0 0.0
    %107 = vmatprep.subr.mxu0 0.0
    %108 = vmatpush1.msra.mxu0 0.0
    %109 = vmatprep.subr.mxu0 0.0
    %110 = vmatpush1.msra.mxu0 0.0
    %111 = vmatprep.subr.mxu0 0.0
    %112 = vmatpush1.msra.mxu0 0.0
    %113 = vmatprep.subr.mxu0 0.0
    %114 = vmatpush1.msra.mxu0 0.0
    %115 = vmatprep.subr.mxu0 0.0
    %116 = vmatpush1.msra.mxu0 0.0
    %117 = vmatprep.subr.mxu0 0.0
    %118 = vmatpush1.msra.mxu0 0.0
    %119 = vmatprep.mubr.f32.mxu0 0.0
    %120 = vmatmul.mubr.f32.gmra.mrb[0].mxu0 %v28
    %v121 = vpop.f32.mrb[0].mxu0
    %v122 = vadd.f32 0.0, %v121
    %v123 = vpop.f32.mrb[0].mxu0
    %124 = vmatprep.mubr.f32.mxu0 0.0
    %125 = vmatmul.mubr.f32.gmra.mrb[0].mxu0 %v31
    %v126 = vpop.f32.mrb[0].mxu0
    %v127 = vadd.f32 0.0, %v126
    %v128 = vpop.f32.mrb[0].mxu0
    %129 = vmatprep.mubr.f32.mxu0 0.0
    %130 = vmatmul.mubr.f32.gmra.mrb[0].mxu0 %v34
    %v131 = vpop.f32.mrb[0].mxu0
    %v132 = vadd.f32 0.0, %v131
    %v133 = vpop.f32.mrb[0].mxu0
    %134 = vmatprep.mubr.f32.mxu0 0.0
    %135 = vmatmul.mubr.f32.gmra.mrb[0].mxu0 %v37
    %v136 = vpop.f32.mrb[0].mxu0
    %v137 = vadd.f32 0.0, %v136
    %v138 = vpop.f32.mrb[0].mxu0
    %139 = vmatprep.mubr.f32.mxu0 0.0
    %140 = vmatmul.mubr.f32.gmra.mrb[0].mxu0 %v40
    %v141 = vpop.f32.mrb[0].mxu0
    %v142 = vadd.f32 0.0, %v141
    %v143 = vpop.f32.mrb[0].mxu0
    %144 = vmatprep.mubr.f32.mxu0 0.0
    %145 = vmatmul.mubr.f32.gmra.mrb[0].mxu0 %v43
    %v146 = vpop.f32.mrb[0].mxu0
    %v147 = vadd.f32 0.0, %v146
    %v148 = vpop.f32.mrb[0].mxu0
    %149 = vmatprep.mubr.f32.mxu0 0.0
    %150 = vmatmul.mubr.f32.gmra.mrb[0].mxu0 %v46
    %v151 = vpop.f32.mrb[0].mxu0
    %v152 = vadd.f32 0.0, %v151
    %v153 = vpop.f32.mrb[0].mxu0
    %154 = vmatprep.mubr.f32.mxu0 0.0
    %155 = vmatmul.mubr.f32.gmra.mrb[0].mxu0 %v49
    %v156 = vpop.f32.mrb[0].mxu0
    %v157 = vadd.f32 0.0, %v156
    %v158 = vpop.f32.mrb[0].mxu0
    %159 = vdwg.mxu0
    %vm160 = vcmask 261120
    %v161 = vsel %vm160, %v122, inf
    %v162 = vsel %vm160, %v127, inf
    %v163 = vsel %vm160, %v132, inf
    %v164 = vsel %vm160, %v137, inf
    %v165 = vsel %vm160, %v142, inf
    %v166 = vmin.f32 %v161, %v165
    %v167 = vsel %vm160, %v147, inf
    %v168 = vmin.f32 %v162, %v167
    %v169 = vsel %vm160, %v152, inf
    %v170 = vmin.f32 %v163, %v169
    %v171 = vsel %vm160, %v157, inf
    %v172 = vmin.f32 %v164, %v171
    %v173 = vmin.f32 %v166, %v168
    %v174 = vmin.f32 %v170, %v172
    %v175 = vmin.f32 %v173, %v174
    %v176 = vrot.slane %v175, 4
    %v177 = vmin.f32 %v175, %v176
    %v178 = vrot.slane %v177, 2
    %v179 = vmin.f32 %v177, %v178
    %v180 = vrot.slane %v179, 1
    %v181 = vmin.f32 %v179, %v180
    %v182 = vlaneseq
    %v183 = vshrl.u32 %v182, 7
    %v184 = vadd.s32 %v183, 8
    %v185 = vadd.s32 %v183, 16
    %v186 = vadd.s32 %v183, 24
    %v187 = vadd.s32 %v183, 32
    %v188 = vadd.s32 %v183, 40
    %v189 = vadd.s32 %v183, 48
    %v190 = vadd.s32 %v183, 56
    %vm191 = vcmp.eq.f32.partialorder %v122, %v181
    %vm192 = vcmp.eq.f32.partialorder %v127, %v181
    %vm193 = vcmp.eq.f32.partialorder %v132, %v181
    %vm194 = vcmp.eq.f32.partialorder %v137, %v181
    %vm195 = vcmp.eq.f32.partialorder %v142, %v181
    %vm196 = vcmp.eq.f32.partialorder %v147, %v181
    %vm197 = vcmp.eq.f32.partialorder %v152, %v181
    %vm198 = vcmp.eq.f32.partialorder %v157, %v181
    %v199 = vsel %vm191, %v183, 64
    %v200 = vsel %vm192, %v184, 64
    %v201 = vsel %vm193, %v185, 64
    %v202 = vsel %vm194, %v186, 64
    %v203 = vsel %vm195, %v187, 64
    %v204 = vsel %vm196, %v188, 64
    %v205 = vsel %vm197, %v189, 64
    %v206 = vsel %vm198, %v190, 64
    %v207 = vsel %vm160, %v199, 2147483647
    %v208 = vsel %vm160, %v200, 2147483647
    %v209 = vsel %vm160, %v201, 2147483647
    %v210 = vsel %vm160, %v202, 2147483647
    %v211 = vsel %vm160, %v203, 2147483647
    %vm212 = vcmp.lt.s32.totalorder %v207, %v211
    %v213 = vsel %vm212, %v207, %v211
    %v214 = vsel %vm160, %v204, 2147483647
    %vm215 = vcmp.lt.s32.totalorder %v208, %v214
    %v216 = vsel %vm215, %v208, %v214
    %v217 = vsel %vm160, %v205, 2147483647
    %vm218 = vcmp.lt.s32.totalorder %v209, %v217
    %v219 = vsel %vm218, %v209, %v217
    %v220 = vsel %vm160, %v206, 2147483647
    %vm221 = vcmp.lt.s32.totalorder %v210, %v220
    %v222 = vsel %vm221, %v210, %v220
    %vm223 = vcmp.lt.s32.totalorder %v213, %v216
    %v224 = vsel %vm223, %v213, %v216
    %vm225 = vcmp.lt.s32.totalorder %v219, %v222
    %v226 = vsel %vm225, %v219, %v222
    %vm227 = vcmp.lt.s32.totalorder %v224, %v226
    %v228 = vsel %vm227, %v224, %v226
    %v229 = vrot.slane %v228, 4
    %vm230 = vcmp.lt.s32.totalorder %v228, %v229
    %v231 = vsel %vm230, %v228, %v229
    %v232 = vrot.slane %v231, 2
    %vm233 = vcmp.lt.s32.totalorder %v231, %v232
    %v234 = vsel %vm233, %v231, %v232
    %v235 = vrot.slane %v234, 1
    %vm236 = vcmp.lt.s32.totalorder %v234, %v235
    %v237 = vsel %vm236, %v234, %v235
    %vm238 = vcmask 253952
    %239 = vst.msk [vmem:[#allocation2] sm:$0x1] %vm238, %v237
    %vm240 = vcmp.eq.s32.totalorder %v183, %v237
    %vm241 = vcmp.eq.s32.totalorder %v184, %v237
    %vm242 = vcmp.eq.s32.totalorder %v185, %v237
    %vm243 = vcmp.eq.s32.totalorder %v186, %v237
    %vm244 = vcmp.eq.s32.totalorder %v187, %v237
    %vm245 = vcmp.eq.s32.totalorder %v188, %v237
    %vm246 = vcmp.eq.s32.totalorder %v189, %v237
    %vm247 = vcmp.eq.s32.totalorder %v190, %v237
    %v248 = vsel %vm240, 1, 0
    %v249 = vsel %vm241, 1, 0
    %v250 = vsel %vm242, 1, 0
    %v251 = vsel %vm243, 1, 0
    %v252 = vsel %vm244, 1, 0
    %v253 = vsel %vm245, 1, 0
    %v254 = vsel %vm246, 1, 0
    %v255 = vsel %vm247, 1, 0
    %v256 = vcvt.s32.f32 %v248
    %v257 = vcvt.s32.f32 %v249
    %v258 = vcvt.s32.f32 %v250
    %v259 = vcvt.s32.f32 %v251
    %v260 = vcvt.s32.f32 %v252
    %v261 = vcvt.s32.f32 %v253
    %v262 = vcvt.s32.f32 %v254
    %v263 = vcvt.s32.f32 %v255
    %264 = vxpose.xlu0.b32.start [1/16] %v18, 128
    %265 = vxpose.xlu0.b32.cont [2/16] %v19, 128
    %266 = vxpose.xlu0.b32.cont [3/16] %v20, 128
    %267 = vxpose.xlu0.b32.cont [4/16] %v21, 128
    %268 = vxpose.xlu0.b32.cont [5/16] %v22, 128
    %269 = vxpose.xlu0.b32.cont [6/16] %v23, 128
    %270 = vxpose.xlu0.b32.cont [7/16] %v24, 128
    %271 = vxpose.xlu0.b32.cont [8/16] %v25, 128
    %272 = vxpose.xlu0.b32.cont [9/16] 0.0, 128
    %273 = vxpose.xlu0.b32.cont [10/16] 0.0, 128
    %274 = vxpose.xlu0.b32.cont [11/16] 0.0, 128
    %275 = vxpose.xlu0.b32.cont [12/16] 0.0, 128
    %276 = vxpose.xlu0.b32.cont [13/16] 0.0, 128
    %277 = vxpose.xlu0.b32.cont [14/16] 0.0, 128
    %278 = vxpose.xlu0.b32.cont [15/16] 0.0, 128
    %279 = vxpose.xlu0.b32.end [16/16] 0.0, 128
    %v280 = vpop.trf.xlu0
    %v281 = vpop.trf.xlu0
    %v282 = vpop.trf.xlu0
    %v283 = vpop.trf.xlu0
    %v284 = vpop.trf.xlu0
    %v285 = vpop.trf.xlu0
    %v286 = vpop.trf.xlu0
    %v287 = vpop.trf.xlu0
    %v288 = vpop.trf.xlu0
    %v289 = vpop.trf.xlu0
    %v290 = vpop.trf.xlu0
    %v291 = vpop.trf.xlu0
    %v292 = vpop.trf.xlu0
    %v293 = vpop.trf.xlu0
    %v294 = vpop.trf.xlu0
    %v295 = vpop.trf.xlu0
    %vm296 = vcmask 523264
    %v298 = vsel %vm296, %v280, 0
    %v301 = vsel %vm296, %v281, 0
    %v304 = vsel %vm296, %v282, 0
    %306 = vmatprep.subr.mxu0 0.0
    %307 = vmatpush1.msra.mxu0 %v256
    %308 = vmatprep.subr.mxu0 0.0
    %309 = vmatpush1.msra.mxu0 %v257
    %310 = vmatprep.subr.mxu0 0.0
    %311 = vmatpush1.msra.mxu0 %v258
    %312 = vmatprep.subr.mxu0 0.0
    %313 = vmatpush1.msra.mxu0 %v259
    %314 = vmatprep.subr.mxu0 0.0
    %315 = vmatpush1.msra.mxu0 %v260
    %316 = vmatprep.subr.mxu0 0.0
    %317 = vmatpush1.msra.mxu0 %v261
    %318 = vmatprep.subr.mxu0 0.0
    %319 = vmatpush1.msra.mxu0 %v262
    %320 = vmatprep.subr.mxu0 0.0
    %321 = vmatpush1.msra.mxu0 %v263
    %322 = vmatprep.subr.mxu0 0.0
    %323 = vmatpush1.msra.mxu0 0.0
    %324 = vmatprep.subr.mxu0 0.0
    %325 = vmatpush1.msra.mxu0 0.0
    %326 = vmatprep.subr.mxu0 0.0
    %327 = vmatpush1.msra.mxu0 0.0
    %328 = vmatprep.subr.mxu0 0.0
    %329 = vmatpush1.msra.mxu0 0.0
    %330 = vmatprep.subr.mxu0 0.0
    %331 = vmatpush1.msra.mxu0 0.0
    %332 = vmatprep.subr.mxu0 0.0
    %333 = vmatpush1.msra.mxu0 0.0
    %334 = vmatprep.subr.mxu0 0.0
    %335 = vmatpush1.msra.mxu0 0.0
    %336 = vmatprep.subr.mxu0 0.0
    %337 = vmatpush1.msra.mxu0 0.0
    %338 = vmatprep.subr.mxu0 0.0
    %339 = vmatpush1.msra.mxu0 0.0
    %340 = vmatprep.subr.mxu0 0.0
    %341 = vmatpush1.msra.mxu0 0.0
    %342 = vmatprep.subr.mxu0 0.0
    %343 = vmatpush1.msra.mxu0 0.0
    %344 = vmatprep.subr.mxu0 0.0
    %345 = vmatpush1.msra.mxu0 0.0
    %346 = vmatprep.subr.mxu0 0.0
    %347 = vmatpush1.msra.mxu0 0.0
    %348 = vmatprep.subr.mxu0 0.0
    %349 = vmatpush1.msra.mxu0 0.0
    %350 = vmatprep.subr.mxu0 0.0
    %351 = vmatpush1.msra.mxu0 0.0
    %352 = vmatprep.subr.mxu0 0.0
    %353 = vmatpush1.msra.mxu0 0.0
    %354 = vmatprep.subr.mxu0 0.0
    %355 = vmatpush1.msra.mxu0 0.0
    %356 = vmatprep.subr.mxu0 0.0
    %357 = vmatpush1.msra.mxu0 0.0
    %358 = vmatprep.subr.mxu0 0.0
    %359 = vmatpush1.msra.mxu0 0.0
    %360 = vmatprep.subr.mxu0 0.0
    %361 = vmatpush1.msra.mxu0 0.0
    %362 = vmatprep.subr.mxu0 0.0
    %363 = vmatpush1.msra.mxu0 0.0
    %364 = vmatprep.subr.mxu0 0.0
    %365 = vmatpush1.msra.mxu0 0.0
    %366 = vmatprep.subr.mxu0 0.0
    %367 = vmatpush1.msra.mxu0 0.0
    %368 = vmatprep.subr.mxu0 0.0
    %369 = vmatpush1.msra.mxu0 0.0
    %370 = vmatprep.mubr.f32.mxu0 0.0
    %371 = vmatmul.mubr.f32.gmra.mrb[0].mxu0 %v298
    %v372 = vpop.f32.mrb[0].mxu0
    %v373 = vadd.f32 0.0, %v372
    %v374 = vpop.f32.mrb[0].mxu0
    %375 = vmatprep.mubr.f32.mxu0 0.0
    %376 = vmatmul.mubr.f32.gmra.mrb[0].mxu0 %v301
    %v377 = vpop.f32.mrb[0].mxu0
    %v378 = vadd.f32 0.0, %v377
    %v379 = vpop.f32.mrb[0].mxu0
    %380 = vmatprep.mubr.f32.mxu0 0.0
    %381 = vmatmul.mubr.f32.gmra.mrb[0].mxu0 %v304
    %v382 = vpop.f32.mrb[0].mxu0
    %v383 = vpop.f32.mrb[0].mxu0
    %384 = vdwg.mxu0
    %v385 = vmul.f32 %v373, -0.5
    %v386 = vmul.f32 %v378, -0.5
    %387 = vst.msk [vmem:[%s2] sm:$0xff] %vm160, %v385
    %388 = vst.msk [vmem:[%s2 + $0x8] sm:$0xff] %vm160, %v386
    %v389 = vsub.f32 %v385, %v15
    %v390 = vsub.f32 %v386, %v16
    %v391 = vmul.f32 %v389, %v389
    %v392 = vmul.f32 %v390, %v390
    %v393 = vsel %vm160, %v391, 0.0
    %v394 = vsel %vm160, %v392, 0.0
    %v395 = vadd.f32 %v393, %v394
    %v396 = vrot.slane %v395, 4
    %v397 = vadd.f32 %v395, %v396
    %v398 = vrot.slane %v397, 2
    %v399 = vadd.f32 %v397, %v398
    %v400 = vrot.slane %v399, 1
    %v401 = vadd.f32 %v399, %v400
    %s402 = smul.u32 0, 32
    %v403 = vlaneseq
    %v404 = vand.u32 %v403, 127
    %v405 = vstv %s402
    %v406 = vadd.s32 %v405, %v404
    %vm407 = vcmp.lt.s32.totalorder %v406, 32
    %v408 = vsel %vm407, %v401, 0.0
    %409 = vst.msk [vmem:[%s4] sm:$0x1] %vm238, %v408
    // Predicated region
    $region10: #{vq_codebook_forward.1} parent=1 // pred_check
      _
    $region11: #{vq_codebook_forward.1} parent=1 // pred_check_branch
      %411 = sbr.rel (0) target = $region13
    $region12: #{vq_codebook_forward.1} parent=1 // pred_region
      _
    $region13: #{vq_codebook_forward.1} parent=1 // pred_fallthru
      _
    // Predicated region
    $region14: #{vq_codebook_forward.1} parent=1 // pred_check
      _
    $region15: #{vq_codebook_forward.1} parent=1 // pred_check_branch
      %413 = sbr.rel (0) target = $region17
    $region16: #{vq_codebook_forward.1} parent=1 // pred_region
      %s415 = ssub.s32 16, 16
      %416 = vsyncadd [#allocation3], %s415
      %s418 = sshll.u32 [#allocation2], 4
      %s419 = int_to_ptr.vmem [resolvable:$true] %s418
      %421 = dma.vmem_to_hbm [thread:$0]  %s419, 16, %s3, [#allocation3]
    $region17: #{vq_codebook_forward.1} parent=1 // pred_fallthru
      _
    // Predicated region
    $region18: #{vq_codebook_forward.1} parent=1 // pred_check
      _
    $region19: #{vq_codebook_forward.1} parent=1 // pred_check_branch
      %423 = sbr.rel (0) target = $region21
    $region20: #{vq_codebook_forward.1} parent=1 // pred_region
      _
    $region21: #{vq_codebook_forward.1} parent=1 // pred_fallthru
      _
    // Predicated region
    $region22: #{vq_codebook_forward.1} parent=1 // pred_check
      _
    $region23: #{vq_codebook_forward.1} parent=1 // pred_check_branch
      %425 = sbr.rel (0) target = $region25
    $region24: #{vq_codebook_forward.1} parent=1 // pred_region
      _
    $region25: #{vq_codebook_forward.1} parent=1 // pred_fallthru
      _
    // Predicated region
    $region26: #{vq_codebook_forward.1} parent=1 // pred_check
      _
    $region27: #{vq_codebook_forward.1} parent=1 // pred_check_branch
      %427 = sbr.rel (0) target = $region29
    $region28: #{vq_codebook_forward.1} parent=1 // pred_region
      %428 = dma.done [#allocation3], 16
    $region29: #{vq_codebook_forward.1} parent=1 // pred_fallthru
      _
    // Predicated region
    $region30: #{vq_codebook_forward.1} parent=1 // pred_check
      _
    $region31: #{vq_codebook_forward.1} parent=1 // pred_check_branch
      %430 = sbr.rel (0) target = $region33
    $region32: #{vq_codebook_forward.1} parent=1 // pred_region
      _
    $region33: #{vq_codebook_forward.1} parent=1 // pred_fallthru
      _
    %431 = vsyncpa [#allocation3], 1

</llo_original>
